<compile_context>
chip_gen: v7x
topology: tpu7x:2x2x1
jax: 0.10.0
libtpu: 0.0.40
codegen_flags: <defaults>
</compile_context>

<pallas_src>
import functools

import jax
import jax.numpy as jnp
from jax.experimental import pallas as pl
from jax.experimental.pallas import tpu as pltpu

LANES = 128


def _telu_kernel(x_ref, o_ref, *, alpha):
    x = x_ref[...]
    # exp -> EUP slot, compare/select/mul -> VPU; the kernel stays DMA-bound
    # on v5e/v6e (and on v7x once both TCs stream).  exp(x) - 1 is kept
    # verbatim from the torch module (expm1 would be more accurate near 0 but
    # is not what the reference computes; EUP op count is identical).
    o_ref[...] = jnp.where(x >= 0, x, alpha * (jnp.exp(x) - 1.0))


def _round_up(v, m):
    return ((v + m - 1) // m) * m


def _num_tensorcores():
    """TensorCores per chip for the block/step heuristic (best-effort)."""
    try:
        kind = (jax.devices()[0].device_kind or "").lower()
    except Exception:
        return 1
    return 2 if "v7" in kind else 1


def telu(x, alpha=0.15, block_rows=4096, inplace=False):
    """TeLU activation as a Pallas TPU kernel (any shape, float dtype).

    Exactly 1 HBM read + 1 HBM write whenever x.size % 128 == 0 (the rows
    axis is never padded -- partial blocks are masked inside the kernel).
    `inplace=True` only requests output/input aliasing; it does NOT reduce
    HBM traffic (still 1R + 1W) and only takes effect on the unpadded path
    when the caller genuinely donates `x` (jit donate_argnums).
    """
    orig_shape = x.shape
    dtype = x.dtype
    n = x.size
    if n == 0:
        return x
    itemsize = jnp.dtype(dtype).itemsize

    x_flat = jnp.ravel(x)                          # free reshape (contiguous)
    padded = (n % LANES) != 0
    if padded:
        # Only lane-raggedness pads (rare for conv activations).  The rows
        # axis below never pads: partial last block reads are clamped and
        # writes are masked by Pallas.
        x_flat = jnp.pad(x_flat, (0, _round_up(n, LANES) - n))
    rows = x_flat.size // LANES
    x2d = x_flat.reshape(rows, LANES)

    # --- block-height heuristic -------------------------------------------
    # Sublane granularity: 8 rows f32, 16 bf16, 32 int8/fp8.
    sub = 8 * max(1, 4 // itemsize)
    # ~256 KiB per block is the measured HBM-roofline knee (~85% of BW);
    # never shrink below it just to manufacture extra (serial) grid steps.
    knee_rows = max(sub, (256 << 10) // (LANES * itemsize))
    # Keep 2 buffers x (in + out) <= ~12 MiB: fits every generation's default
    # scoped-VMEM (16 MiB v5e, 32 MiB v6e/v7x) with headroom, so no
    # vmem_limit_bytes override is ever needed (v7x has only 64 MiB/TC).
    vmem_cap_rows = max(sub, ((12 << 20) // (4 * LANES * itemsize)) // sub * sub)

    n_cores = _num_tensorcores()
    if n_cores >= 2:
        # v7x: split rows across both TensorCores first, then aim for ~4
        # steps per core without dropping below the roofline knee.
        per_core = _round_up(pl.cdiv(rows, n_cores), sub)
        want = min(per_core,
                   max(knee_rows, _round_up(pl.cdiv(rows, 4 * n_cores), sub)))
    else:
        # Single TC (v5e/v6e): ~3 steps is enough to overlap read/write DMAs.
        want = max(knee_rows, _round_up(pl.cdiv(rows, 3), sub))

    tr = min(want, int(block_rows), vmem_cap_rows)
    tr = max(sub, (tr // sub) * sub)               # sublane multiple
    tr = min(tr, rows)                             # small input: one full block
    grid = (pl.cdiv(rows, tr),)

    if n_cores >= 2 and grid[0] >= 2:
        # Plain "parallel" barely changes codegen; CORE_PARALLEL actually
        # shards the axis across v7x's two TensorCores.
        dim_sem = (pltpu.CORE_PARALLEL,)
    else:
        dim_sem = ("parallel",)

    out2d = pl.pallas_call(
        functools.partial(_telu_kernel, alpha=float(alpha)),
        out_shape=jax.ShapeDtypeStruct((rows, LANES), dtype),
        grid_spec=pltpu.PrefetchScalarGridSpec(
            num_scalar_prefetch=0,
            grid=grid,
            in_specs=[pl.BlockSpec((tr, LANES), lambda i: (i, 0))],
            out_specs=pl.BlockSpec((tr, LANES), lambda i: (i, 0)),
        ),
        compiler_params=pltpu.CompilerParams(dimension_semantics=dim_sem),
        # Aliasing never saves bandwidth (still 1R+1W); only meaningful on the
        # unpadded path with a genuinely donated input buffer.
        input_output_aliases={0: 0} if (inplace and not padded) else {},
    )(x2d)

    if padded:
        return out2d.reshape(-1)[:n].reshape(orig_shape)
    return out2d.reshape(orig_shape)               # free reshape


if __name__ == "__main__":
    alpha = 0.15

    def ref(v):
        return jnp.where(v >= 0, v, alpha * (jnp.exp(v) - 1.0))

    # NCHW conv-activation-like input (tile-aligned: no pad, no slice).
    x = jax.random.normal(jax.random.PRNGKey(0), (2, 4, 16, 16), jnp.float32) * 3.0
    y = jax.block_until_ready(telu(x, alpha=alpha))
    assert y.shape == x.shape and y.dtype == x.dtype
    assert jnp.max(jnp.abs(y - ref(x))) < 1e-6

    # Lane-aligned but rows-ragged: exercises partial-block masking (no pad).
    x2 = jax.random.normal(jax.random.PRNGKey(1), (700, 128), jnp.float32)
    y2 = jax.block_until_ready(telu(x2, alpha=alpha))
    assert y2.shape == x2.shape and y2.dtype == x2.dtype
    assert jnp.max(jnp.abs(y2 - ref(x2))) < 1e-6

    # x.size % 128 != 0: minimal-pad fallback path.
    x3 = jax.random.normal(jax.random.PRNGKey(2), (3, 5, 7), jnp.float32)
    y3 = jax.block_until_ready(telu(x3, alpha=alpha))
    assert y3.shape == x3.shape and y3.dtype == x3.dtype
    assert jnp.max(jnp.abs(y3 - ref(x3))) < 1e-6

    print("KERNEL_OK")
</pallas_src>

<mosaic_0001>
module attributes {stable_mosaic.version = 11 : i64} {
  func.func @_telu_kernel(%arg0: i32, %arg1: memref<16x128xf32, #tpu.memory_space<vmem>>, %arg2: memref<16x128xf32, #tpu.memory_space<vmem>>) attributes {dimension_semantics = [#tpu.dimension_semantics<parallel>], iteration_bounds = array<i64: 1>, scalar_prefetch = 0 : i64, scratch_operands = 0 : i64, tpu.core_type = #tpu.core_type<tc>, window_params = [{transform_indices = @transform_0, window_bounds = array<i64: 16, 128>}, {transform_indices = @transform_1, window_bounds = array<i64: 16, 128>}]} {
    %c0 = arith.constant 0 : index
    %c0_0 = arith.constant 0 : index
    %0 = vector.load %arg1[%c0, %c0_0] : memref<16x128xf32, #tpu.memory_space<vmem>>, vector<16x128xf32>
    %cst = arith.constant 0.000000e+00 : f32
    %1 = vector.broadcast %cst : f32 to vector<16x128xf32>
    %2 = arith.cmpf oge, %0, %1 : vector<16x128xf32>
    %3 = math.exp %0 : vector<16x128xf32>
    %cst_1 = arith.constant 1.000000e+00 : f32
    %4 = vector.broadcast %cst_1 : f32 to vector<16x128xf32>
    %5 = arith.subf %3, %4 : vector<16x128xf32>
    %cst_2 = arith.constant 1.500000e-01 : f32
    %6 = vector.broadcast %cst_2 : f32 to vector<16x128xf32>
    %7 = arith.mulf %6, %5 : vector<16x128xf32>
    %8 = arith.select %2, %0, %7 : vector<16x128xi1>, vector<16x128xf32>
    %c0_3 = arith.constant 0 : index
    %c0_4 = arith.constant 0 : index
    %9 = vector.load %arg2[%c0_3, %c0_4] : memref<16x128xf32, #tpu.memory_space<vmem>>, vector<16x128xf32>
    tpu.vector_store %arg2[%c0_3, %c0_4], %8 {strides = array<i32>} : memref<16x128xf32, #tpu.memory_space<vmem>>, vector<16x128xf32>,
    return
  }
  func.func @transform_0(%arg0: i32) -> (i32, i32) {
    %c0_i32 = arith.constant 0 : i32
    %c0_i32_0 = arith.constant 0 : i32
    return %arg0, %c0_i32 : i32, i32
  }
  func.func @transform_1(%arg0: i32) -> (i32, i32) {
    %c0_i32 = arith.constant 0 : i32
    %c0_i32_0 = arith.constant 0 : i32
    return %arg0, %c0_i32 : i32, i32
  }
}

</mosaic_0001>

<llo_original>
// kernel: tpu_custom_call.1
$region0: #{tpu_custom_call.1}
  #allocation0 [shape = 'u32[]', space=smem, size = 0x4, offset = 0x4, fixed_abs, tag = 'smem constant byte address 0x4 - core index']
  #allocation1 [shape = 'u32[144,128]{1,0:T(1,128)}', space=vmem, size = 0x12000, scoped, tag = 'internal scratch']
  %s0 = inlined_call_operand.hbm [shape: f32[16,128], index: 0, kind: input, shape index: {}]
  %s1 = inlined_call_operand.hbm [shape: f32[16,128], index: 1, kind: output, shape index: {}]
  %s2 = sld [smem:[#allocation0]]
  $region18: #{tpu_custom_call.1} parent=0
    _
  %s4 = ssub.s32 1, %s2
  %s5 = scalar_select 0, %s4, %s2
  $region1: #{tpu_custom_call.1} parent=0
    #allocation2 [shape = 'u8[8192]{0}', space=vmem, size = 0x2000, scoped, tag = 'input window, operand 0, single buffered']
    #allocation3 [shape = 's32[1]{0}', space=sflag, size = 0x4, scoped, tag = 'scoped memory for tpu_custom_call.1']
    #allocation4 [shape = 's32[1]{0}', space=sflag, size = 0x4, scoped, tag = 'scoped memory for tpu_custom_call.1']
    #allocation5 [shape = 'u8[8192]{0}', space=vmem, size = 0x2000, scoped, tag = 'output window, operand 0, single buffered']
    %6 = vsyncpa [#allocation3], 0
    %7 = vsyncpa [#allocation4], 0
    // Predicated region
    $region2: #{tpu_custom_call.1} parent=1 // pred_check
      _
    $region3: #{tpu_custom_call.1} parent=1 // pred_check_branch
      %9 = sbr.rel (0) target = $region5
    $region4: #{tpu_custom_call.1} parent=1 // pred_region
      %s11 = ssub.s32 256, 256
      %12 = vsyncadd [#allocation3], %s11
      %s13 = sshll.u32 [#allocation2], 4
      %s14 = int_to_ptr.vmem [resolvable:$true] %s13
      %19 = dma.hbm_to_vmem [thread:$0]  %s0, 256, %s14, [#allocation3], 128, 128, 8
    $region5: #{tpu_custom_call.1} parent=1 // pred_fallthru
      _
    // Predicated region
    $region6: #{tpu_custom_call.1} parent=1 // pred_check
      _
    $region7: #{tpu_custom_call.1} parent=1 // pred_check_branch
      %21 = sbr.rel (0) target = $region9
    $region8: #{tpu_custom_call.1} parent=1 // pred_region
      %22 = dma.done [#allocation3], 256
    $region9: #{tpu_custom_call.1} parent=1 // pred_fallthru
      _
    %v23 = vld [vmem:[#allocation2] sm:$0xff]
    %v24 = vld [vmem:[#allocation2 + $0x8] sm:$0xff]
    %vm25 = vcmp.ge.f32.partialorder %v23, 0.0
    %vm26 = vcmp.ge.f32.partialorder %v24, 0.0
    %v27 = vmul.f32 %v23, 1.442695
    %v28 = vpow.pop %v27
    %v29 = vmul.f32 %v24, 1.442695
    %v30 = vpow.pop %v29
    %v31 = vsub.f32 %v28, 1.0
    %v32 = vsub.f32 %v30, 1.0
    %v33 = vmul.f32 %v31, 0.15
    %v34 = vmul.f32 %v32, 0.15
    %v35 = vsel %vm25, %v23, %v33
    %v36 = vsel %vm26, %v24, %v34
    %37 = vst [vmem:[#allocation5] sm:$0xff] %v35
    %38 = vst [vmem:[#allocation5 + $0x8] sm:$0xff] %v36
    // Predicated region
    $region10: #{tpu_custom_call.1} parent=1 // pred_check
      _
    $region11: #{tpu_custom_call.1} parent=1 // pred_check_branch
      %40 = sbr.rel (0) target = $region13
    $region12: #{tpu_custom_call.1} parent=1 // pred_region
      %s42 = ssub.s32 256, 256
      %43 = vsyncadd [#allocation4], %s42
      %s44 = sshll.u32 [#allocation5], 4
      %s45 = int_to_ptr.vmem [resolvable:$true] %s44
      %50 = dma.vmem_to_hbm [thread:$0]  %s45, 256, %s1, [#allocation4], 128, 128, 8
    $region13: #{tpu_custom_call.1} parent=1 // pred_fallthru
      _
    // Predicated region
    $region14: #{tpu_custom_call.1} parent=1 // pred_check
      _
    $region15: #{tpu_custom_call.1} parent=1 // pred_check_branch
      %52 = sbr.rel (0) target = $region17
    $region16: #{tpu_custom_call.1} parent=1 // pred_region
      %53 = dma.done [#allocation4], 256
    $region17: #{tpu_custom_call.1} parent=1 // pred_fallthru
      _
    %54 = vsyncpa [#allocation3], 1
    %55 = vsyncpa [#allocation4], 1

</llo_original>
